<compile_context>
chip_gen: v6e
topology: v6e:2x2x1
jax: 0.10.0
libtpu: 0.0.40
codegen_flags: <defaults>
</compile_context>

<pallas_src>
import jax
import jax.numpy as jnp
from jax.experimental import pallas as pl
from jax.experimental.pallas import tpu as pltpu

_LANE = 128
_DEFAULT_TB = 512  # lane-axis (batch) tile; multiple of 128


def _density_kernel(x_ref, inv_rho_ref, out_ref):
    # x_ref:       [N, TB]  mole fractions, batch lane-dense
    # inv_rho_ref: [N, 1]   precomputed 1 / rho_pure (broadcast over lanes)
    # out_ref:     [1, TB]  mixture density
    x = x_ref[...]
    inv_rho = inv_rho_ref[...]                                   # [N, 1]
    molar_volume = jnp.sum(x * inv_rho, axis=0, keepdims=True)   # [1, TB] sublane reduce
    out_ref[...] = 1.0 / molar_volume


def pallas_density(component: jax.Array, inv_rho_pure: jax.Array) -> jax.Array:
    """component: [B, N] mole fractions; inv_rho_pure: [N] -> returns [B, 1]."""
    B, N = component.shape

    # Lane-dense layout: [N, B], batch on the 128-wide lane axis.
    x_t = component.astype(jnp.float32).T                        # [N, B]
    inv_rho_2d = inv_rho_pure.reshape(N, 1).astype(jnp.float32)  # [N, 1]

    # Batch tile: multiple of 128; don't over-pad tiny batches.
    tb = min(_DEFAULT_TB, pl.cdiv(B, _LANE) * _LANE)
    B_pad = pl.cdiv(B, tb) * tb
    if B_pad != B:
        # Padded lanes compute 1/0 = inf and are sliced off below.
        x_t = jnp.pad(x_t, ((0, 0), (0, B_pad - B)))

    out_t = pl.pallas_call(
        _density_kernel,
        out_shape=jax.ShapeDtypeStruct((1, B_pad), jnp.float32),
        grid=(B_pad // tb,),
        in_specs=[
            pl.BlockSpec((N, tb), lambda i: (0, i)),
            pl.BlockSpec((N, 1), lambda i: (0, 0)),
        ],
        out_specs=pl.BlockSpec((1, tb), lambda i: (0, i)),
        compiler_params=pltpu.CompilerParams(
            dimension_semantics=("parallel",),
        ),
    )(x_t, inv_rho_2d)

    return out_t[:, :B].T                                        # [B, 1]


class SimpleGradPallas:
    """JAX/Pallas analogue of sgtpy's SimpleGrad nn.Module."""

    def __init__(self, rho_pure: jax.Array):
        # `eos` stand-in: holds pure-component densities; density() is the kernel.
        # Hoist the reciprocal out of the hot path (model constant).
        self._inv_rho_pure = (1.0 / rho_pure).astype(jnp.float32)
        self.method_dict = {"density": self._density}

    def _density(self, component: jax.Array) -> jax.Array:
        return pallas_density(component, self._inv_rho_pure)

    def __call__(self, component: jax.Array, method: str) -> jax.Array:
        method_fn = self.method_dict[method]
        return method_fn(component)


if __name__ == "__main__":
    key = jax.random.PRNGKey(0)
    B, N = 16, 8  # batch of mixtures, number of chemical components

    # Deterministic mole fractions (positive, normalized per row).
    raw = jax.random.uniform(key, (B, N), dtype=jnp.float32, minval=0.1, maxval=1.0)
    component = raw / jnp.sum(raw, axis=-1, keepdims=True)

    # Deterministic pure-component molar densities (synthetic "EOS parameters").
    rho_pure = 10.0 + jnp.arange(N, dtype=jnp.float32) * 2.5

    model = SimpleGradPallas(rho_pure)
    out = model(component, "density")
    out = jax.block_until_ready(out)

    # Reference check in plain JAX.
    ref = 1.0 / jnp.sum(component / rho_pure[None, :], axis=-1, keepdims=True)
    assert out.shape == (B, 1)
    assert jnp.allclose(out, ref, rtol=1e-5, atol=1e-5)

    print("KERNEL_OK")
</pallas_src>

<mosaic_0001>
module attributes {stable_mosaic.version = 11 : i64} {
  func.func @_density_kernel(%arg0: i32, %arg1: memref<8x128xf32, #tpu.memory_space<vmem>>, %arg2: memref<8x1xf32, #tpu.memory_space<vmem>>, %arg3: memref<1x128xf32, #tpu.memory_space<vmem>>) attributes {dimension_semantics = [#tpu.dimension_semantics<parallel>], iteration_bounds = array<i64: 1>, scalar_prefetch = 0 : i64, scratch_operands = 0 : i64, tpu.core_type = #tpu.core_type<tc>, window_params = [{transform_indices = @transform_0, window_bounds = array<i64: 8, 128>}, {pipeline_mode = #tpu.pipeline_mode<synchronous>, transform_indices = @transform_1, window_bounds = array<i64: 8, 1>}, {transform_indices = @transform_2, window_bounds = array<i64: 1, 128>}]} {
    %c0 = arith.constant 0 : index
    %c0_0 = arith.constant 0 : index
    %0 = vector.load %arg1[%c0, %c0_0] : memref<8x128xf32, #tpu.memory_space<vmem>>, vector<8x128xf32>
    %c0_1 = arith.constant 0 : index
    %c0_2 = arith.constant 0 : index
    %1 = vector.load %arg2[%c0_1, %c0_2] : memref<8x1xf32, #tpu.memory_space<vmem>>, vector<8x1xf32>
    %2 = vector.broadcast %1 : vector<8x1xf32> to vector<8x128xf32>
    %3 = arith.mulf %0, %2 : vector<8x128xf32>
    %cst = arith.constant dense<0.000000e+00> : vector<128xf32>
    %4 = vector.multi_reduction <add>, %3, %cst [0] : vector<8x128xf32> to vector<128xf32>
    %5 = vector.shape_cast %4 : vector<128xf32> to vector<1x128xf32>
    %cst_3 = arith.constant 1.000000e+00 : f32
    %6 = vector.broadcast %cst_3 : f32 to vector<1x128xf32>
    %7 = arith.divf %6, %5 : vector<1x128xf32>
    %c0_4 = arith.constant 0 : index
    %c0_5 = arith.constant 0 : index
    %8 = vector.load %arg3[%c0_4, %c0_5] : memref<1x128xf32, #tpu.memory_space<vmem>>, vector<1x128xf32>
    tpu.vector_store %arg3[%c0_4, %c0_5], %7 {strides = array<i32>} : memref<1x128xf32, #tpu.memory_space<vmem>>, vector<1x128xf32>,
    return
  }
  func.func @transform_0(%arg0: i32) -> (i32, i32) {
    %c0_i32 = arith.constant 0 : i32
    %c0_i32_0 = arith.constant 0 : i32
    return %c0_i32, %arg0 : i32, i32
  }
  func.func @transform_1(%arg0: i32) -> (i32, i32) {
    %c0_i32 = arith.constant 0 : i32
    %c0_i32_0 = arith.constant 0 : i32
    %c0_i32_1 = arith.constant 0 : i32
    return %c0_i32, %c0_i32_0 : i32, i32
  }
  func.func @transform_2(%arg0: i32) -> (i32, i32) {
    %c0_i32 = arith.constant 0 : i32
    %c0_i32_0 = arith.constant 0 : i32
    return %c0_i32, %arg0 : i32, i32
  }
}

</mosaic_0001>

<llo_original>
// kernel: tpu_custom_call.1
$region0: #{tpu_custom_call.1}
  #allocation0 [shape = 'u32[]', space=smem, size = 0x4, offset = 0x4, fixed_abs, tag = 'smem constant byte address 0x4 - core index']
  #allocation1 [shape = 'u32[144,128]{1,0:T(1,128)}', space=vmem, size = 0x12000, scoped, tag = 'internal scratch']
  %s0 = inlined_call_operand.vmem [shape: f32[8,128], index: 0, kind: input, shape index: {}]
  %s1 = inlined_call_operand.vmem [shape: f32[8,1], index: 1, kind: input, shape index: {}]
  %s2 = inlined_call_operand.hbm [shape: f32[1,128], index: 2, kind: output, shape index: {}]
  %s3 = sld [smem:[#allocation0]]
  $region18: #{tpu_custom_call.1} parent=0
    _
  %s5 = ssub.s32 1, %s3
  %s6 = scalar_select 0, %s5, %s3
  $region1: #{tpu_custom_call.1} parent=0
    #allocation2 [shape = 'u8[512]{0}', space=vmem, size = 0x400, scoped, tag = 'output window, operand 0, single buffered']
    #allocation3 [shape = 's32[1]{0}', space=sflag, size = 0x4, scoped, tag = 'scoped memory for tpu_custom_call.1']
    %7 = vsyncpa [#allocation3], 0
    // Predicated region
    $region2: #{tpu_custom_call.1} parent=1 // pred_check
      _
    $region3: #{tpu_custom_call.1} parent=1 // pred_check_branch
      %9 = sbr.rel (0) target = $region5
    $region4: #{tpu_custom_call.1} parent=1 // pred_region
      _
    $region5: #{tpu_custom_call.1} parent=1 // pred_fallthru
      _
    // Predicated region
    $region6: #{tpu_custom_call.1} parent=1 // pred_check
      _
    $region7: #{tpu_custom_call.1} parent=1 // pred_check_branch
      %11 = sbr.rel (0) target = $region9
    $region8: #{tpu_custom_call.1} parent=1 // pred_region
      _
    $region9: #{tpu_custom_call.1} parent=1 // pred_fallthru
      _
    %v12 = vld [vmem:[%s0] sm:$0xff]
    %v13 = vld [vmem:[%s1] sm:$0xff]
    %15 = vset.pattern.permute.xlu0 0
    %16 = vperm.xlu0 %15, %v13
    %v17 = vpop.permute.xlu0 %16
    %v19 = vmul.f32 %v12, %v17
    %v20 = vrot.slane %v19, 4
    %v21 = vadd.f32 %v19, %v20
    %v22 = vrot.slane %v21, 2
    %v23 = vadd.f32 %v21, %v22
    %v24 = vrot.slane %v23, 1
    %v25 = vadd.f32 %v23, %v24
    %v26 = vrcp.pop %v25
    %v27 = vmul.f32 1.0, %v26
    %28 = vst [vmem:[#allocation2] sm:$0x1] %v27
    // Predicated region
    $region10: #{tpu_custom_call.1} parent=1 // pred_check
      _
    $region11: #{tpu_custom_call.1} parent=1 // pred_check_branch
      %30 = sbr.rel (0) target = $region13
    $region12: #{tpu_custom_call.1} parent=1 // pred_region
      %s32 = ssub.s32 16, 16
      %33 = vsyncadd [#allocation3], %s32
      %s35 = sshll.u32 [#allocation2], 4
      %s36 = int_to_ptr.vmem [resolvable:$true] %s35
      %38 = dma.vmem_to_hbm [thread:$0]  %s36, 16, %s2, [#allocation3]
    $region13: #{tpu_custom_call.1} parent=1 // pred_fallthru
      _
    // Predicated region
    $region14: #{tpu_custom_call.1} parent=1 // pred_check
      _
    $region15: #{tpu_custom_call.1} parent=1 // pred_check_branch
      %40 = sbr.rel (0) target = $region17
    $region16: #{tpu_custom_call.1} parent=1 // pred_region
      %41 = dma.done [#allocation3], 16
    $region17: #{tpu_custom_call.1} parent=1 // pred_fallthru
      _
    %42 = vsyncpa [#allocation3], 1

</llo_original>
